<compile_context>
chip_gen: v6e
topology: v6e:2x2x1
jax: 0.10.0
libtpu: 0.0.40
codegen_flags: <defaults>
</compile_context>

<pallas_src>
import functools

import jax
import jax.numpy as jnp
from jax.experimental import pallas as pl
from jax.experimental.pallas import tpu as pltpu


def _neg_loss_kernel(x_ref, ivec_ref, out_ref, *, num_pos: int, use_sim: bool):
    # x: (P+N, D) — first num_pos rows are context (target=1), rest negatives (target=0).
    x = x_ref[...].astype(jnp.float32)     # (M, D)
    iv = ivec_ref[...].astype(jnp.float32)  # (1, D)

    # Logits via VPU broadcast-multiply + XLU cross-lane reduction (MXU not used:
    # a width-1 matmul output would waste >99% of the systolic array).
    logits = jnp.sum(x * iv, axis=-1, keepdims=True)  # (M, 1)

    if use_sim:
        # F.cosine_similarity(x1, x2, dim=1, eps=1e-8):
        #   dot / (max(||x1||, eps) * max(||x2||, eps))
        # Using 1/max(||v||, eps) == rsqrt(max(sum(v^2), eps^2)) — rsqrt goes to
        # the otherwise-idle EUP slot instead of a sqrt + VALU divide sequence.
        eps_sq = jnp.float32(1e-16)  # (1e-8)^2
        x_sq = jnp.sum(x * x, axis=-1, keepdims=True)      # (M, 1)
        iv_sq = jnp.sum(iv * iv, axis=-1, keepdims=True)   # (1, 1)
        inv_norm = jax.lax.rsqrt(jnp.maximum(x_sq, eps_sq)) * jax.lax.rsqrt(
            jnp.maximum(iv_sq, eps_sq))
        logits = logits * inv_norm

    # BCEWithLogits (stable):
    #   target=1: max(x,0) - x + log1p(exp(-|x|)) == softplus(-x)
    #   target=0: max(x,0)     + log1p(exp(-|x|)) == softplus(+x)
    # One fused pass via a per-row sign: -1 for the first num_pos rows, +1 after.
    rows = jax.lax.broadcasted_iota(jnp.int32, logits.shape, 0)        # (M, 1)
    sign = jnp.where(rows < num_pos, jnp.float32(-1.0), jnp.float32(1.0))
    z = sign * logits
    loss = jnp.maximum(z, 0.0) + jnp.log1p(jnp.exp(-jnp.abs(z)))       # softplus(z)

    # Scalar output straight to SMEM (avoids masked (1,1) vector store + tiny DMA).
    out_ref[0] = jnp.sum(loss)


def neg_loss_v2(ivec, contextvecs, negvecs, *, use_sim: bool = False):
    """ivec: (D,), contextvecs: (P, D), negvecs: (N, D) -> scalar float32 loss."""
    d = ivec.shape[0]
    num_pos = contextvecs.shape[0]
    iv2 = ivec.reshape(1, d)                                # native dtype, no cast
    x = jnp.concatenate([contextvecs, negvecs], axis=0)     # (P+N, D), native dtype

    out = pl.pallas_call(
        functools.partial(_neg_loss_kernel, num_pos=num_pos, use_sim=use_sim),
        out_shape=jax.ShapeDtypeStruct((1,), jnp.float32),
        # Single grid point: the whole problem (a few KiB) is one VMEM tile.
        # Block shapes equal the full array extents, so the (8,128) divisibility
        # rule does not apply.
        in_specs=[
            pl.BlockSpec(x.shape, lambda: (0, 0)),
            pl.BlockSpec(iv2.shape, lambda: (0, 0)),
        ],
        out_specs=pl.BlockSpec(memory_space=pltpu.SMEM),
    )(x, iv2)
    return out[0]


def _reference(ivec, contextvecs, negvecs, use_sim=False):
    if use_sim:
        eps = 1e-8
        def cos(x, v):
            num = x @ v
            den = jnp.maximum(jnp.linalg.norm(x, axis=1), eps) * jnp.maximum(
                jnp.linalg.norm(v), eps)
            return num / den
        p = cos(contextvecs, ivec)
        n = cos(negvecs, ivec)
    else:
        p = contextvecs @ ivec
        n = negvecs @ ivec
    x = jnp.concatenate([p, n])
    y = jnp.concatenate([jnp.ones_like(p), jnp.zeros_like(n)])
    return jnp.sum(jnp.maximum(x, 0) - x * y + jnp.log1p(jnp.exp(-jnp.abs(x))))


if __name__ == "__main__":
    key = jax.random.PRNGKey(0)
    k1, k2, k3 = jax.random.split(key, 3)

    D = 32       # embedding dim
    P = 8        # number of context vectors
    N = 8        # number of negative samples

    ivec = jax.random.normal(k1, (D,), dtype=jnp.float32)
    contextvecs = jax.random.normal(k2, (P, D), dtype=jnp.float32)
    negvecs = jax.random.normal(k3, (N, D), dtype=jnp.float32)

    # Default path (use_sim=False), matching the module's default construction.
    loss = neg_loss_v2(ivec, contextvecs, negvecs, use_sim=False)
    jax.block_until_ready(loss)
    ref = _reference(ivec, contextvecs, negvecs, use_sim=False)
    assert jnp.allclose(loss, ref, rtol=2e-5, atol=1e-4), (loss, ref)

    # Also exercise the cosine-similarity branch.
    loss_sim = neg_loss_v2(ivec, contextvecs, negvecs, use_sim=True)
    jax.block_until_ready(loss_sim)
    ref_sim = _reference(ivec, contextvecs, negvecs, use_sim=True)
    assert jnp.allclose(loss_sim, ref_sim, rtol=2e-5, atol=1e-4), (loss_sim, ref_sim)

    print("KERNEL_OK")
</pallas_src>

<mosaic_0001>
module attributes {stable_mosaic.version = 11 : i64} {
  func.func @_neg_loss_kernel(%arg0: memref<16x32xf32, #tpu.memory_space<vmem>>, %arg1: memref<1x32xf32, #tpu.memory_space<vmem>>, %arg2: memref<1xf32, #tpu.memory_space<smem>>) attributes {dimension_semantics = [], scalar_prefetch = 0 : i64, scratch_operands = 0 : i64, tpu.core_type = #tpu.core_type<tc>} {
    %c0 = arith.constant 0 : index
    %c0_0 = arith.constant 0 : index
    %0 = vector.load %arg0[%c0, %c0_0] : memref<16x32xf32, #tpu.memory_space<vmem>>, vector<16x32xf32>
    %c0_1 = arith.constant 0 : index
    %c0_2 = arith.constant 0 : index
    %1 = vector.load %arg1[%c0_1, %c0_2] : memref<1x32xf32, #tpu.memory_space<vmem>>, vector<1x32xf32>
    %2 = vector.broadcast %1 : vector<1x32xf32> to vector<16x32xf32>
    %3 = arith.mulf %0, %2 : vector<16x32xf32>
    %cst = arith.constant dense<0.000000e+00> : vector<16xf32>
    %4 = vector.multi_reduction <add>, %3, %cst [1] : vector<16x32xf32> to vector<16xf32>
    %5 = vector.shape_cast %4 : vector<16xf32> to vector<16x1xf32>
    %6 = tpu.iota {dimensions = array<i32: 0>} : vector<16x1xi32>
    %c8_i32 = arith.constant 8 : i32
    %7 = vector.broadcast %c8_i32 : i32 to vector<16x1xi32>
    %8 = arith.cmpi slt, %6, %7 : vector<16x1xi32>
    %cst_3 = arith.constant -1.000000e+00 : f32
    %cst_4 = arith.constant 1.000000e+00 : f32
    %9 = vector.broadcast %cst_3 : f32 to vector<16x1xf32>
    %10 = vector.broadcast %cst_4 : f32 to vector<16x1xf32>
    %11 = arith.select %8, %9, %10 : vector<16x1xi1>, vector<16x1xf32>
    %12 = arith.mulf %11, %5 : vector<16x1xf32>
    %cst_5 = arith.constant 0.000000e+00 : f32
    %13 = vector.broadcast %cst_5 : f32 to vector<16x1xf32>
    %14 = arith.maximumf %12, %13 : vector<16x1xf32>
    %15 = math.absf %12 : vector<16x1xf32>
    %cst_6 = arith.constant 0.000000e+00 : f32
    %16 = vector.broadcast %cst_6 : f32 to vector<16x1xf32>
    %17 = arith.subf %16, %15 : vector<16x1xf32>
    %18 = math.exp %17 : vector<16x1xf32>
    %19 = math.log1p %18 : vector<16x1xf32>
    %20 = arith.addf %14, %19 : vector<16x1xf32>
    %21 = vector.shape_cast %20 : vector<16x1xf32> to vector<1x16x1xf32>
    %cst_7 = arith.constant dense<0.000000e+00> : vector<1xf32>
    %22 = vector.multi_reduction <add>, %21, %cst_7 [1, 2] : vector<1x16x1xf32> to vector<1xf32>
    %23 = vector.shape_cast %22 : vector<1xf32> to vector<1x1x1xf32>
    %24 = vector.extract %23[0, 0, 0] : f32 from vector<1x1x1xf32>
    %c0_8 = arith.constant 0 : index
    %25 = memref.load %arg2[%c0_8] : memref<1xf32, #tpu.memory_space<smem>>
    memref.store %24, %arg2[%c0_8] : memref<1xf32, #tpu.memory_space<smem>>
    return
  }
}

</mosaic_0001>

<llo_original>
// kernel: tpu_custom_call.1
$region0: #{tpu_custom_call.1}
  #allocation0 [shape = 'u32[]', space=smem, size = 0x4, offset = 0x4, fixed_abs, tag = 'smem constant byte address 0x4 - core index']
  #allocation1 [shape = 'u32[144,128]{1,0:T(1,128)}', space=vmem, size = 0x12000, scoped, tag = 'internal scratch']
  %s0 = inlined_call_operand.hbm [shape: f32[16,32], index: 0, kind: input, shape index: {}]
  %s1 = inlined_call_operand.vmem [shape: f32[1,32], index: 1, kind: input, shape index: {}]
  %s2 = inlined_call_operand.hbm [shape: f32[1], index: 2, kind: output, shape index: {}]
  %s3 = sld [smem:[#allocation0]]
  $region22: #{tpu_custom_call.1} parent=0
    _
  %s5 = ssub.s32 1, %s3
  %s6 = scalar_select 0, %s5, %s3
  $region1: #{tpu_custom_call.1} parent=0
    #allocation2 [shape = 'u8[8192]{0}', space=vmem, size = 0x2000, scoped, tag = 'input window, operand 0, single buffered']
    #allocation3 [shape = 's32[1]{0}', space=sflag, size = 0x4, scoped, tag = 'scoped memory for tpu_custom_call.1']
    #allocation4 [shape = 's32[1]{0}', space=sflag, size = 0x4, scoped, tag = 'scoped memory for tpu_custom_call.1']
    #allocation5 [shape = 'u8[512]{0}', space=smem, size = 0x200, scoped, tag = 'output window, operand 0, single buffered']
    %7 = vsyncpa [#allocation3], 0
    %8 = vsyncpa [#allocation4], 0
    // Predicated region
    $region2: #{tpu_custom_call.1} parent=1 // pred_check
      _
    $region3: #{tpu_custom_call.1} parent=1 // pred_check_branch
      %10 = sbr.rel (0) target = $region5
    $region4: #{tpu_custom_call.1} parent=1 // pred_region
      %s12 = ssub.s32 256, 256
      %13 = vsyncadd [#allocation3], %s12
      %s14 = sshll.u32 [#allocation2], 4
      %s15 = int_to_ptr.vmem [resolvable:$true] %s14
      %20 = dma.hbm_to_vmem [thread:$0]  %s0, 256, %s15, [#allocation3], 128, 128, 8
    $region5: #{tpu_custom_call.1} parent=1 // pred_fallthru
      _
    // Predicated region
    $region6: #{tpu_custom_call.1} parent=1 // pred_check
      _
    $region7: #{tpu_custom_call.1} parent=1 // pred_check_branch
      %22 = sbr.rel (0) target = $region9
    $region8: #{tpu_custom_call.1} parent=1 // pred_region
      _
    $region9: #{tpu_custom_call.1} parent=1 // pred_fallthru
      _
    // Predicated region
    $region10: #{tpu_custom_call.1} parent=1 // pred_check
      _
    $region11: #{tpu_custom_call.1} parent=1 // pred_check_branch
      %24 = sbr.rel (0) target = $region13
    $region12: #{tpu_custom_call.1} parent=1 // pred_region
      %25 = dma.done [#allocation3], 256
    $region13: #{tpu_custom_call.1} parent=1 // pred_fallthru
      _
    %v26 = vld [vmem:[#allocation2] sm:$0xff]
    %v27 = vld [vmem:[#allocation2 + $0x8] sm:$0xff]
    %v28 = vld [vmem:[%s1] sm:$0x1]
    %v30 = vlaneseq
    %v31 = vshrl.u32 %v30, 7
    %v32 = vsub.s32 0, %v31
    %v33 = vrot.slane %v28, %v32
    %v35 = vmul.f32 %v26, %v33
    %v36 = vmul.f32 %v27, %v33
    %vm37 = vcmask 261120
    %v38 = vsel %vm37, %v35, 0.0
    %39 = vadd.xlane.f32.xlu0 %v38
    %v40 = vpop.xlane.xlu0 %39
    %v41 = vsel %vm37, %v36, 0.0
    %42 = vadd.xlane.f32.xlu0 %v41
    %v43 = vpop.xlane.xlu0 %42
    %v44 = vlaneseq
    %v45 = vshrl.u32 %v44, 7
    %v46 = vadd.s32 %v45, 8
    %vm47 = vcmp.lt.s32.totalorder %v45, 8
    %vm48 = vcmp.lt.s32.totalorder %v46, 8
    %v49 = vsel %vm47, -1.0, 1.0
    %v50 = vsel %vm48, -1.0, 1.0
    %v51 = vmul.f32 %v49, %v40
    %v52 = vmul.f32 %v50, %v43
    %v53 = vmax.f32 %v51, 0.0
    %v54 = vmax.f32 %v52, 0.0
    %v55 = vand.u32 2147483647, %v51
    %v56 = vand.u32 2147483647, %v52
    %v57 = vsub.f32 0.0, %v55
    %v58 = vsub.f32 0.0, %v56
    %v59 = vmul.f32 %v57, 1.442695
    %v60 = vpow.pop %v59
    %v61 = vmul.f32 %v58, 1.442695
    %v62 = vpow.pop %v61
    %v63 = vadd.f32 %v60, 1.0
    %v64 = vlog2.pop %v63
    %v65 = vmul.f32 %v64, 0.6931472
    %v66 = vmul.f32 -0.5, %v60
    %v67 = vadd.f32 %v66, 1.0
    %v68 = vmul.f32 %v67, %v60
    %v69 = vand.u32 2147483647, %v60
    %vm70 = vcmp.lt.f32.partialorder %v69, 0.0004427343
    %v71 = vsel %vm70, %v68, %v65
    %v72 = vadd.f32 %v62, 1.0
    %v73 = vlog2.pop %v72
    %v74 = vmul.f32 %v73, 0.6931472
    %v75 = vmul.f32 -0.5, %v62
    %v76 = vadd.f32 %v75, 1.0
    %v77 = vmul.f32 %v76, %v62
    %v78 = vand.u32 2147483647, %v62
    %vm79 = vcmp.lt.f32.partialorder %v78, 0.0004427343
    %v80 = vsel %vm79, %v77, %v74
    %v81 = vadd.f32 %v53, %v71
    %v82 = vadd.f32 %v54, %v80
    %vm83 = vcmask 7168
    %v84 = vsel %vm83, %v81, 0.0
    %v85 = vsel %vm83, %v82, 0.0
    %v86 = vadd.f32 %v84, %v85
    %87 = vadd.xlane.f32.xlu0 %v86
    %v88 = vpop.xlane.xlu0 %87
    %v89 = vrot.slane %v88, 4
    %v90 = vadd.f32 %v88, %v89
    %v91 = vrot.slane %v90, 2
    %v92 = vadd.f32 %v90, %v91
    %v93 = vrot.slane %v92, 1
    %v94 = vadd.f32 %v92, %v93
    %s95 = vtos %v94
    %s96 = scalar_lea.smem [#allocation5], 0
    %97 = sst [smem:[%s96]] %s95
    // Predicated region
    $region14: #{tpu_custom_call.1} parent=1 // pred_check
      _
    $region15: #{tpu_custom_call.1} parent=1 // pred_check_branch
      %99 = sbr.rel (0) target = $region17
    $region16: #{tpu_custom_call.1} parent=1 // pred_region
      %s101 = ssub.s32 16, 16
      %102 = vsyncadd [#allocation4], %s101
      %105 = dma.smem_to_hbm [#allocation5], 16, %s2, [#allocation4]
    $region17: #{tpu_custom_call.1} parent=1 // pred_fallthru
      _
    // Predicated region
    $region18: #{tpu_custom_call.1} parent=1 // pred_check
      _
    $region19: #{tpu_custom_call.1} parent=1 // pred_check_branch
      %107 = sbr.rel (0) target = $region21
    $region20: #{tpu_custom_call.1} parent=1 // pred_region
      %108 = dma.done [#allocation4], 16
    $region21: #{tpu_custom_call.1} parent=1 // pred_fallthru
      _
    %109 = sfence
    %110 = vsyncpa [#allocation3], 1
    %111 = vsyncpa [#allocation4], 1

</llo_original>
